<compile_context>
chip_gen: v6e
topology: v6e:2x2x1
jax: 0.10.0
libtpu: 0.0.40
codegen_flags: <defaults>
</compile_context>

<pallas_src>
import functools

import jax
import jax.numpy as jnp
from jax.experimental import pallas as pl
from jax.experimental.pallas import tpu as pltpu

NUM_LAYER = 3   # num_layer from the module __init__


def _round_up(x, m):
    return (x + m - 1) // m * m


def nn_ccrf_kernel(x_ref, wf_ref, bf_ref, k_ref, p_ref, out_ref, *,
                   num_layer, split):
    """NN_CCRF forward for one (tb, D) batch tile; weights resident in VMEM.

    x_ref : (tb, D) f32 input tile
    wf_ref: (D, D)  feature_model weight, pre-transposed (bf16 or f32)
    bf_ref: (1, D)  f32 feature_model bias
    k_ref : (D, D)  shared CCRF kernel weight, pre-transposed (bf16 or f32)
    p_ref : (3,)    SMEM f32 scalars [w_feat, w_pair, b_pair]
    out_ref:(tb, D) f32 output tile
    """
    cdt = wf_ref.dtype            # matmul operand dtype (bf16 or f32)
    w_feat = p_ref[0]             # 0.5
    w_pair = p_ref[1]             # 0.5
    b_pair = p_ref[2]

    k_t = k_ref[...]

    # feature_model: Linear(D, D) + bias, f32 accumulation.
    feat = jnp.dot(x_ref[...].astype(cdt), wf_ref[...],
                   preferred_element_type=jnp.float32) + bf_ref[...]

    def ccrf(f):
        # num_layer outer CCRF iterations; each runs the shared-weight
        # pairwise model (num_layer x Linear(D,D,no bias) -> ReLU) and blends
        # through the Linear(2,1) head: f <- w_feat*f + w_pair*pair + b_pair.
        for _ in range(num_layer):
            pair = f
            for _ in range(num_layer):
                pair = jnp.maximum(
                    jnp.dot(pair.astype(cdt), k_t,
                            preferred_element_type=jnp.float32), 0.0)
            f = w_feat * f + w_pair * pair + b_pair
        return f

    # TODO(synk): if still MXU-bound after the tile/bf16 changes, k_t could be
    #             staged once in MXU weight regs via pltpu.matmul_push_rhs.
    if split is None:
        out_ref[...] = ccrf(feat).astype(out_ref.dtype)
    else:
        # Two independent sub-tile chains: the dependent matmuls of one chain
        # serialize on the MXU result FIFO (v5e/v6e); a second independent
        # chain gives the scheduler work to fill those drain bubbles.
        h = split
        tb = out_ref.shape[0]
        fa = ccrf(feat[:h, :])
        fb = ccrf(feat[h:, :])
        out_ref[pl.ds(0, h), :] = fa.astype(out_ref.dtype)
        out_ref[pl.ds(h, tb - h), :] = fb.astype(out_ref.dtype)


def prepare_weights(wf, bf, k, pair_weight, pair_bias, *, use_bf16=True):
    """One-time weight preparation (hoisted out of the per-call path).

    wf         : (D, D) feature_model Linear weight (PyTorch out-major layout)
    bf         : (D,)   feature_model bias
    k          : (D, D) CCRF kernel Linear weight (bias=False, PyTorch layout)
    pair_weight: (1, 2) weights_feature_pairwise Linear weight
    pair_bias  : (1,)   weights_feature_pairwise Linear bias
    Returns (wf_t, bf, k_t, params) ready for nn_ccrf_forward.
    """
    cdt = jnp.bfloat16 if use_bf16 else jnp.float32
    wf_t = jnp.asarray(wf, jnp.float32).T.astype(cdt)   # kernel computes x @ W
    k_t = jnp.asarray(k, jnp.float32).T.astype(cdt)
    bf2 = jnp.asarray(bf, jnp.float32).reshape(1, -1)   # bias kept f32
    params = jnp.concatenate([
        jnp.asarray(pair_weight, jnp.float32).reshape(-1),
        jnp.asarray(pair_bias, jnp.float32).reshape(-1),
    ])                                                  # (3,) -> SMEM
    return wf_t, bf2, k_t, params


def _choose_tb(B, block_b):
    """Batch tile: big tiles for throughput, >=2 blocks when B allows (v7x)."""
    block_b = _round_up(block_b, 8)
    if B <= 8:
        return B                      # single tiny block (== full batch dim)
    if B >= 2 * block_b:
        return block_b
    return min(block_b, _round_up((B + 1) // 2, 8))


def nn_ccrf_forward(x, wf_t, bf, k_t, params, *, num_layer=NUM_LAYER,
                    block_b=512):
    """x: (B, D) f32; wf_t/k_t: (D, D) pre-transposed; bf: (1, D); params: (3,)."""
    B, D = x.shape
    tb = _choose_tb(B, block_b)
    n_blocks = pl.cdiv(B, tb)
    split = (tb // 16) * 8 if tb >= 16 else None

    kernel = functools.partial(nn_ccrf_kernel, num_layer=num_layer,
                               split=split)

    n_mm = 1 + num_layer * num_layer
    flops = 2 * B * D * D * n_mm
    wbytes = (wf_t.size + k_t.size) * wf_t.dtype.itemsize
    bytes_accessed = 4 * (2 * B * D + D + 3) + wbytes

    out = pl.pallas_call(
        kernel,
        out_shape=jax.ShapeDtypeStruct((B, D), jnp.float32),
        grid=(n_blocks,),
        in_specs=[
            pl.BlockSpec((tb, D), lambda i: (i, 0)),            # x tile (pipelined)
            pl.BlockSpec((D, D), lambda i: (0, 0)),             # wf_t (resident)
            pl.BlockSpec((1, D), lambda i: (0, 0)),             # bf   (resident)
            pl.BlockSpec((D, D), lambda i: (0, 0)),             # k_t  (resident)
            pl.BlockSpec(memory_space=pltpu.MemorySpace.SMEM),  # params (3,)
        ],
        out_specs=pl.BlockSpec((tb, D), lambda i: (i, 0)),
        compiler_params=pltpu.CompilerParams(
            dimension_semantics=("parallel",)),
        cost_estimate=pl.CostEstimate(flops=flops, transcendentals=0,
                                      bytes_accessed=bytes_accessed),
    )(x, wf_t, bf, k_t, params)
    return out


def reference_forward(x, wf_t, bf, k_t, params, *, num_layer=NUM_LAYER):
    """Pure-JAX mirror with the same operand dtypes / f32 accumulation."""
    cdt = wf_t.dtype
    feat = jnp.dot(x.astype(cdt), wf_t,
                   preferred_element_type=jnp.float32) + bf
    w_feat, w_pair, b_pair = params[0], params[1], params[2]
    for _ in range(num_layer):
        pair = feat
        for _ in range(num_layer):
            pair = jnp.maximum(
                jnp.dot(pair.astype(cdt), k_t,
                        preferred_element_type=jnp.float32), 0.0)
        feat = w_feat * feat + w_pair * pair + b_pair
    return feat


def _make_problem(key, B, D):
    kx, kwf, kbf, kbp = jax.random.split(key, 4)
    x = jax.random.normal(kx, (B, D), dtype=jnp.float32)

    # Synthetic feature_model Linear(D, D) + bias (deterministic init).
    wf = jax.random.normal(kwf, (D, D), dtype=jnp.float32) * 0.05
    bf = jax.random.normal(kbf, (D,), dtype=jnp.float32) * 0.05

    # CCRF kernel Linear(D, D, bias=False), Init.constant_(0.01).
    k = jnp.full((D, D), 0.01, dtype=jnp.float32)

    # weights_feature_pairwise Linear(2, 1, bias=True), weight Init.constant_(0.5).
    pair_w = jnp.full((1, 2), 0.5, dtype=jnp.float32)
    pair_b = (jax.random.uniform(kbp, (1,), dtype=jnp.float32) - 0.5) * 0.2
    return x, wf, bf, k, pair_w, pair_b


if __name__ == "__main__":
    D = 32                      # dim_inputs (== num_regions)
    key = jax.random.PRNGKey(0)
    keys = jax.random.split(key, 3)

    ok = True

    # bf16-MXU path (default): tiny batch (grid=1), partial-tail batch
    # (masked last block), and a multi-block 512-row-tile batch.
    for kk, B in zip(keys, (8, 300, 1024)):
        x, wf, bf, k, pw, pb = _make_problem(kk, B, D)
        wf_t, bf2, k_t, params = prepare_weights(wf, bf, k, pw, pb,
                                                 use_bf16=True)
        out = jax.block_until_ready(nn_ccrf_forward(x, wf_t, bf2, k_t, params))
        ref = reference_forward(x, wf_t, bf2, k_t, params)
        ok &= out.shape == (B, D)
        ok &= bool(jnp.allclose(out, ref, atol=5e-3, rtol=5e-3))

    # f32 path (original-module numerics), tight tolerance.
    x, wf, bf, k, pw, pb = _make_problem(keys[0], 8, D)
    wf_t, bf2, k_t, params = prepare_weights(wf, bf, k, pw, pb, use_bf16=False)
    out = jax.block_until_ready(nn_ccrf_forward(x, wf_t, bf2, k_t, params))
    ref = reference_forward(x, wf_t, bf2, k_t, params)
    ok &= bool(jnp.allclose(out, ref, atol=1e-4, rtol=1e-4))

    assert ok, "mismatch vs reference"
    print("KERNEL_OK")
</pallas_src>

<mosaic_0001>
module attributes {stable_mosaic.version = 11 : i64} {
  func.func @nn_ccrf_kernel(%arg0: i32, %arg1: memref<8x32xf32, #tpu.memory_space<vmem>>, %arg2: memref<32x32xbf16, #tpu.memory_space<vmem>>, %arg3: memref<1x32xf32, #tpu.memory_space<vmem>>, %arg4: memref<32x32xbf16, #tpu.memory_space<vmem>>, %arg5: memref<3xf32, #tpu.memory_space<smem>>, %arg6: memref<8x32xf32, #tpu.memory_space<vmem>>) attributes {dimension_semantics = [#tpu.dimension_semantics<parallel>], iteration_bounds = array<i64: 1>, scalar_prefetch = 0 : i64, scratch_operands = 0 : i64, tpu.core_type = #tpu.core_type<tc>, window_params = [{transform_indices = @transform_0, window_bounds = array<i64: 8, 32>}, {pipeline_mode = #tpu.pipeline_mode<synchronous>, transform_indices = @transform_1, window_bounds = array<i64: 32, 32>}, {pipeline_mode = #tpu.pipeline_mode<synchronous>, transform_indices = @transform_2, window_bounds = array<i64: 1, 32>}, {pipeline_mode = #tpu.pipeline_mode<synchronous>, transform_indices = @transform_3, window_bounds = array<i64: 32, 32>}, {transform_indices = @transform_4, window_bounds = array<i64: 3>}, {transform_indices = @transform_5, window_bounds = array<i64: 8, 32>}]} {
    %c0 = arith.constant 0 : index
    %0 = memref.load %arg5[%c0] : memref<3xf32, #tpu.memory_space<smem>>
    %c1 = arith.constant 1 : index
    %1 = memref.load %arg5[%c1] : memref<3xf32, #tpu.memory_space<smem>>
    %c2 = arith.constant 2 : index
    %2 = memref.load %arg5[%c2] : memref<3xf32, #tpu.memory_space<smem>>
    %c0_0 = arith.constant 0 : index
    %c0_1 = arith.constant 0 : index
    %3 = vector.load %arg4[%c0_0, %c0_1] : memref<32x32xbf16, #tpu.memory_space<vmem>>, vector<32x32xbf16>
    %c0_2 = arith.constant 0 : index
    %c0_3 = arith.constant 0 : index
    %4 = vector.load %arg1[%c0_2, %c0_3] : memref<8x32xf32, #tpu.memory_space<vmem>>, vector<8x32xf32>
    %5 = arith.truncf %4 : vector<8x32xf32> to vector<8x32xbf16>
    %c0_4 = arith.constant 0 : index
    %c0_5 = arith.constant 0 : index
    %6 = vector.load %arg2[%c0_4, %c0_5] : memref<32x32xbf16, #tpu.memory_space<vmem>>, vector<32x32xbf16>
    %cst = arith.constant dense<0.000000e+00> : vector<8x32xf32>
    %7 = tpu.matmul %5, %6, %cst {dimension_numbers = #tpu.dot_dimension_numbers<[1], [0], [0], [1], [0, 0, 1, 1], [], []>} : vector<8x32xbf16>, vector<32x32xbf16>, vector<8x32xf32> -> vector<8x32xf32>
    %c0_6 = arith.constant 0 : index
    %c0_7 = arith.constant 0 : index
    %8 = vector.load %arg3[%c0_6, %c0_7] : memref<1x32xf32, #tpu.memory_space<vmem>>, vector<1x32xf32>
    %9 = vector.broadcast %8 : vector<1x32xf32> to vector<8x32xf32>
    %10 = arith.addf %7, %9 : vector<8x32xf32>
    %11 = arith.truncf %10 : vector<8x32xf32> to vector<8x32xbf16>
    %cst_8 = arith.constant dense<0.000000e+00> : vector<8x32xf32>
    %12 = tpu.matmul %11, %3, %cst_8 {dimension_numbers = #tpu.dot_dimension_numbers<[1], [0], [0], [1], [0, 0, 1, 1], [], []>} : vector<8x32xbf16>, vector<32x32xbf16>, vector<8x32xf32> -> vector<8x32xf32>
    %cst_9 = arith.constant 0.000000e+00 : f32
    %13 = vector.broadcast %cst_9 : f32 to vector<8x32xf32>
    %14 = arith.maximumf %12, %13 : vector<8x32xf32>
    %15 = arith.truncf %14 : vector<8x32xf32> to vector<8x32xbf16>
    %cst_10 = arith.constant dense<0.000000e+00> : vector<8x32xf32>
    %16 = tpu.matmul %15, %3, %cst_10 {dimension_numbers = #tpu.dot_dimension_numbers<[1], [0], [0], [1], [0, 0, 1, 1], [], []>} : vector<8x32xbf16>, vector<32x32xbf16>, vector<8x32xf32> -> vector<8x32xf32>
    %cst_11 = arith.constant 0.000000e+00 : f32
    %17 = vector.broadcast %cst_11 : f32 to vector<8x32xf32>
    %18 = arith.maximumf %16, %17 : vector<8x32xf32>
    %19 = arith.truncf %18 : vector<8x32xf32> to vector<8x32xbf16>
    %cst_12 = arith.constant dense<0.000000e+00> : vector<8x32xf32>
    %20 = tpu.matmul %19, %3, %cst_12 {dimension_numbers = #tpu.dot_dimension_numbers<[1], [0], [0], [1], [0, 0, 1, 1], [], []>} : vector<8x32xbf16>, vector<32x32xbf16>, vector<8x32xf32> -> vector<8x32xf32>
    %cst_13 = arith.constant 0.000000e+00 : f32
    %21 = vector.broadcast %cst_13 : f32 to vector<8x32xf32>
    %22 = arith.maximumf %20, %21 : vector<8x32xf32>
    %23 = vector.broadcast %0 : f32 to vector<8x32xf32>
    %24 = arith.mulf %23, %10 : vector<8x32xf32>
    %25 = vector.broadcast %1 : f32 to vector<8x32xf32>
    %26 = arith.mulf %25, %22 : vector<8x32xf32>
    %27 = arith.addf %24, %26 : vector<8x32xf32>
    %28 = vector.broadcast %2 : f32 to vector<8x32xf32>
    %29 = arith.addf %27, %28 : vector<8x32xf32>
    %30 = arith.truncf %29 : vector<8x32xf32> to vector<8x32xbf16>
    %cst_14 = arith.constant dense<0.000000e+00> : vector<8x32xf32>
    %31 = tpu.matmul %30, %3, %cst_14 {dimension_numbers = #tpu.dot_dimension_numbers<[1], [0], [0], [1], [0, 0, 1, 1], [], []>} : vector<8x32xbf16>, vector<32x32xbf16>, vector<8x32xf32> -> vector<8x32xf32>
    %cst_15 = arith.constant 0.000000e+00 : f32
    %32 = vector.broadcast %cst_15 : f32 to vector<8x32xf32>
    %33 = arith.maximumf %31, %32 : vector<8x32xf32>
    %34 = arith.truncf %33 : vector<8x32xf32> to vector<8x32xbf16>
    %cst_16 = arith.constant dense<0.000000e+00> : vector<8x32xf32>
    %35 = tpu.matmul %34, %3, %cst_16 {dimension_numbers = #tpu.dot_dimension_numbers<[1], [0], [0], [1], [0, 0, 1, 1], [], []>} : vector<8x32xbf16>, vector<32x32xbf16>, vector<8x32xf32> -> vector<8x32xf32>
    %cst_17 = arith.constant 0.000000e+00 : f32
    %36 = vector.broadcast %cst_17 : f32 to vector<8x32xf32>
    %37 = arith.maximumf %35, %36 : vector<8x32xf32>
    %38 = arith.truncf %37 : vector<8x32xf32> to vector<8x32xbf16>
    %cst_18 = arith.constant dense<0.000000e+00> : vector<8x32xf32>
    %39 = tpu.matmul %38, %3, %cst_18 {dimension_numbers = #tpu.dot_dimension_numbers<[1], [0], [0], [1], [0, 0, 1, 1], [], []>} : vector<8x32xbf16>, vector<32x32xbf16>, vector<8x32xf32> -> vector<8x32xf32>
    %cst_19 = arith.constant 0.000000e+00 : f32
    %40 = vector.broadcast %cst_19 : f32 to vector<8x32xf32>
    %41 = arith.maximumf %39, %40 : vector<8x32xf32>
    %42 = vector.broadcast %0 : f32 to vector<8x32xf32>
    %43 = arith.mulf %42, %29 : vector<8x32xf32>
    %44 = vector.broadcast %1 : f32 to vector<8x32xf32>
    %45 = arith.mulf %44, %41 : vector<8x32xf32>
    %46 = arith.addf %43, %45 : vector<8x32xf32>
    %47 = vector.broadcast %2 : f32 to vector<8x32xf32>
    %48 = arith.addf %46, %47 : vector<8x32xf32>
    %49 = arith.truncf %48 : vector<8x32xf32> to vector<8x32xbf16>
    %cst_20 = arith.constant dense<0.000000e+00> : vector<8x32xf32>
    %50 = tpu.matmul %49, %3, %cst_20 {dimension_numbers = #tpu.dot_dimension_numbers<[1], [0], [0], [1], [0, 0, 1, 1], [], []>} : vector<8x32xbf16>, vector<32x32xbf16>, vector<8x32xf32> -> vector<8x32xf32>
    %cst_21 = arith.constant 0.000000e+00 : f32
    %51 = vector.broadcast %cst_21 : f32 to vector<8x32xf32>
    %52 = arith.maximumf %50, %51 : vector<8x32xf32>
    %53 = arith.truncf %52 : vector<8x32xf32> to vector<8x32xbf16>
    %cst_22 = arith.constant dense<0.000000e+00> : vector<8x32xf32>
    %54 = tpu.matmul %53, %3, %cst_22 {dimension_numbers = #tpu.dot_dimension_numbers<[1], [0], [0], [1], [0, 0, 1, 1], [], []>} : vector<8x32xbf16>, vector<32x32xbf16>, vector<8x32xf32> -> vector<8x32xf32>
    %cst_23 = arith.constant 0.000000e+00 : f32
    %55 = vector.broadcast %cst_23 : f32 to vector<8x32xf32>
    %56 = arith.maximumf %54, %55 : vector<8x32xf32>
    %57 = arith.truncf %56 : vector<8x32xf32> to vector<8x32xbf16>
    %cst_24 = arith.constant dense<0.000000e+00> : vector<8x32xf32>
    %58 = tpu.matmul %57, %3, %cst_24 {dimension_numbers = #tpu.dot_dimension_numbers<[1], [0], [0], [1], [0, 0, 1, 1], [], []>} : vector<8x32xbf16>, vector<32x32xbf16>, vector<8x32xf32> -> vector<8x32xf32>
    %cst_25 = arith.constant 0.000000e+00 : f32
    %59 = vector.broadcast %cst_25 : f32 to vector<8x32xf32>
    %60 = arith.maximumf %58, %59 : vector<8x32xf32>
    %61 = vector.broadcast %0 : f32 to vector<8x32xf32>
    %62 = arith.mulf %61, %48 : vector<8x32xf32>
    %63 = vector.broadcast %1 : f32 to vector<8x32xf32>
    %64 = arith.mulf %63, %60 : vector<8x32xf32>
    %65 = arith.addf %62, %64 : vector<8x32xf32>
    %66 = vector.broadcast %2 : f32 to vector<8x32xf32>
    %67 = arith.addf %65, %66 : vector<8x32xf32>
    %c0_26 = arith.constant 0 : index
    %c0_27 = arith.constant 0 : index
    %68 = vector.load %arg6[%c0_26, %c0_27] : memref<8x32xf32, #tpu.memory_space<vmem>>, vector<8x32xf32>
    tpu.vector_store %arg6[%c0_26, %c0_27], %67 {strides = array<i32>} : memref<8x32xf32, #tpu.memory_space<vmem>>, vector<8x32xf32>,
    return
  }
  func.func @transform_0(%arg0: i32) -> (i32, i32) {
    %c0_i32 = arith.constant 0 : i32
    %c0_i32_0 = arith.constant 0 : i32
    return %arg0, %c0_i32 : i32, i32
  }
  func.func @transform_1(%arg0: i32) -> (i32, i32) {
    %c0_i32 = arith.constant 0 : i32
    %c0_i32_0 = arith.constant 0 : i32
    %c0_i32_1 = arith.constant 0 : i32
    return %c0_i32, %c0_i32_0 : i32, i32
  }
  func.func @transform_2(%arg0: i32) -> (i32, i32) {
    %c0_i32 = arith.constant 0 : i32
    %c0_i32_0 = arith.constant 0 : i32
    %c0_i32_1 = arith.constant 0 : i32
    return %c0_i32, %c0_i32_0 : i32, i32
  }
  func.func @transform_3(%arg0: i32) -> (i32, i32) {
    %c0_i32 = arith.constant 0 : i32
    %c0_i32_0 = arith.constant 0 : i32
    %c0_i32_1 = arith.constant 0 : i32
    return %c0_i32, %c0_i32_0 : i32, i32
  }
  func.func @transform_4(%arg0: i32) -> i32 {
    %c0_i32 = arith.constant 0 : i32
    %c0_i32_0 = arith.constant 0 : i32
    return %c0_i32 : i32
  }
  func.func @transform_5(%arg0: i32) -> (i32, i32) {
    %c0_i32 = arith.constant 0 : i32
    %c0_i32_0 = arith.constant 0 : i32
    return %arg0, %c0_i32 : i32, i32
  }
}

</mosaic_0001>

<llo_original>
// kernel: tpu_custom_call.1
$region0: #{tpu_custom_call.1}
  #allocation0 [shape = 'u32[]', space=smem, size = 0x4, offset = 0x4, fixed_abs, tag = 'smem constant byte address 0x4 - core index']
  #allocation1 [shape = 'u32[144,128]{1,0:T(1,128)}', space=vmem, size = 0x12000, scoped, tag = 'internal scratch']
  %s0 = inlined_call_operand.hbm [shape: f32[8,32], index: 0, kind: input, shape index: {}]
  %s1 = inlined_call_operand.hbm [shape: bf16[32,32], index: 1, kind: input, shape index: {}]
  %s2 = inlined_call_operand.vmem [shape: f32[1,32], index: 2, kind: input, shape index: {}]
  %s3 = inlined_call_operand.hbm [shape: bf16[32,32], index: 3, kind: input, shape index: {}]
  %s4 = inlined_call_operand.vmem [shape: f32[3], index: 4, kind: input, shape index: {}]
  %s5 = inlined_call_operand.hbm [shape: f32[8,32], index: 5, kind: output, shape index: {}]
  %s6 = sld [smem:[#allocation0]]
  $region46: #{tpu_custom_call.1} parent=0
    _
  %s8 = ssub.s32 1, %s6
  %s9 = scalar_select 0, %s8, %s6
  $region1: #{tpu_custom_call.1} parent=0
    #allocation2 [shape = 'u8[4096]{0}', space=vmem, size = 0x1000, scoped, tag = 'input window, operand 0, single buffered']
    #allocation3 [shape = 's32[1]{0}', space=sflag, size = 0x4, scoped, tag = 'scoped memory for tpu_custom_call.1']
    #allocation4 [shape = 's32[1]{0}', space=sflag, size = 0x4, scoped, tag = 'scoped memory for tpu_custom_call.1']
    #allocation5 [shape = 's32[1]{0}', space=sflag, size = 0x4, scoped, tag = 'scoped memory for tpu_custom_call.1']
    #allocation6 [shape = 'u8[8192]{0}', space=vmem, size = 0x2000, scoped, tag = 'input window, operand 1, single buffered']
    #allocation7 [shape = 's32[1]{0}', space=sflag, size = 0x4, scoped, tag = 'scoped memory for tpu_custom_call.1']
    #allocation8 [shape = 'u8[8192]{0}', space=vmem, size = 0x2000, scoped, tag = 'input window, operand 3, single buffered']
    #allocation9 [shape = 'u8[512]{0}', space=smem, size = 0x200, scoped, tag = 'input window, operand 4, single buffered']
    #allocation10 [shape = 'u8[4096]{0}', space=vmem, size = 0x1000, scoped, tag = 'output window, operand 0, single buffered']
    %10 = vsyncpa [#allocation3], 0
    %11 = vsyncpa [#allocation7], 0
    %12 = vsyncpa [#allocation5], 0
    %13 = vsyncpa [#allocation4], 0
    // Predicated region
    $region2: #{tpu_custom_call.1} parent=1 // pred_check
      _
    $region3: #{tpu_custom_call.1} parent=1 // pred_check_branch
      %15 = sbr.rel (0) target = $region5
    $region4: #{tpu_custom_call.1} parent=1 // pred_region
      %s17 = ssub.s32 128, 128
      %18 = vsyncadd [#allocation3], %s17
      %s20 = sshll.u32 [#allocation2], 4
      %s21 = int_to_ptr.vmem [resolvable:$true] %s20
      %23 = dma.hbm_to_vmem [thread:$0]  %s0, 128, %s21, [#allocation3]
    $region5: #{tpu_custom_call.1} parent=1 // pred_fallthru
      _
    // Predicated region
    $region6: #{tpu_custom_call.1} parent=1 // pred_check
      _
    $region7: #{tpu_custom_call.1} parent=1 // pred_check_branch
      %25 = sbr.rel (0) target = $region9
    $region8: #{tpu_custom_call.1} parent=1 // pred_region
      %s27 = ssub.s32 256, 256
      %28 = vsyncadd [#allocation7], %s27
      %s29 = sshll.u32 [#allocation6], 4
      %s30 = int_to_ptr.vmem [resolvable:$true] %s29
      %35 = dma.hbm_to_vmem [thread:$0]  %s1, 256, %s30, [#allocation7], 64, 64, 4
    $region9: #{tpu_custom_call.1} parent=1 // pred_fallthru
      _
    // Predicated region
    $region10: #{tpu_custom_call.1} parent=1 // pred_check
      _
    $region11: #{tpu_custom_call.1} parent=1 // pred_check_branch
      %37 = sbr.rel (0) target = $region13
    $region12: #{tpu_custom_call.1} parent=1 // pred_region
      _
    $region13: #{tpu_custom_call.1} parent=1 // pred_fallthru
      _
    // Predicated region
    $region14: #{tpu_custom_call.1} parent=1 // pred_check
      _
    $region15: #{tpu_custom_call.1} parent=1 // pred_check_branch
      %39 = sbr.rel (0) target = $region17
    $region16: #{tpu_custom_call.1} parent=1 // pred_region
      %s41 = ssub.s32 256, 256
      %42 = vsyncadd [#allocation7], %s41
      %s43 = sshll.u32 [#allocation8], 4
      %s44 = int_to_ptr.vmem [resolvable:$true] %s43
      %49 = dma.hbm_to_vmem [thread:$0]  %s3, 256, %s44, [#allocation7], 64, 64, 4
    $region17: #{tpu_custom_call.1} parent=1 // pred_fallthru
      _
    // Predicated region
    $region18: #{tpu_custom_call.1} parent=1 // pred_check
      _
    $region19: #{tpu_custom_call.1} parent=1 // pred_check_branch
      %51 = sbr.rel (0) target = $region21
    $region20: #{tpu_custom_call.1} parent=1 // pred_region
      %s53 = ssub.s32 16, 16
      %54 = vsyncadd [#allocation5], %s53
      %s56 = sshll.u32 %s4, 4
      %s57 = int_to_ptr.vmem [resolvable:$true] %s56
      %59 = dma.vmem_to_smem %s57, 16, [#allocation9], [#allocation5]
    $region21: #{tpu_custom_call.1} parent=1 // pred_fallthru
      _
    // Predicated region
    $region22: #{tpu_custom_call.1} parent=1 // pred_check
      _
    $region23: #{tpu_custom_call.1} parent=1 // pred_check_branch
      %61 = sbr.rel (0) target = $region25
    $region24: #{tpu_custom_call.1} parent=1 // pred_region
      %62 = dma.done [#allocation3], 128
    $region25: #{tpu_custom_call.1} parent=1 // pred_fallthru
      _
    // Predicated region
    $region26: #{tpu_custom_call.1} parent=1 // pred_check
      _
    $region27: #{tpu_custom_call.1} parent=1 // pred_check_branch
      %64 = sbr.rel (0) target = $region29
    $region28: #{tpu_custom_call.1} parent=1 // pred_region
      %65 = dma.done [#allocation7], 256
    $region29: #{tpu_custom_call.1} parent=1 // pred_fallthru
      _
    // Predicated region
    $region30: #{tpu_custom_call.1} parent=1 // pred_check
      _
    $region31: #{tpu_custom_call.1} parent=1 // pred_check_branch
      %67 = sbr.rel (0) target = $region33
    $region32: #{tpu_custom_call.1} parent=1 // pred_region
      %68 = dma.done [#allocation7], 256
    $region33: #{tpu_custom_call.1} parent=1 // pred_fallthru
      _
    // Predicated region
    $region34: #{tpu_custom_call.1} parent=1 // pred_check
      _
    $region35: #{tpu_custom_call.1} parent=1 // pred_check_branch
      %70 = sbr.rel (0) target = $region37
    $region36: #{tpu_custom_call.1} parent=1 // pred_region
      %71 = dma.done [#allocation5], 16
    $region37: #{tpu_custom_call.1} parent=1 // pred_fallthru
      _
    %72 = sfence
    %s74 = sld [smem:[#allocation9]]
    %s75 = sld [smem:[#allocation9 + $0x1]]
    %s76 = sld [smem:[#allocation9 + $0x2]]
    %v77 = vld [vmem:[#allocation8] sm:$0xf]
    %v78 = vld [vmem:[#allocation8 + $0x4] sm:$0xf]
    %v79 = vld [vmem:[#allocation8 + $0x8] sm:$0xf]
    %v80 = vld [vmem:[#allocation8 + $0xc] sm:$0xf]
    %v81 = vld [vmem:[#allocation2] sm:$0xff]
    %v82 = vpack.c.bf16 %v81, %v81
    %v83 = vld [vmem:[#allocation6] sm:$0xf]
    %v84 = vld [vmem:[#allocation6 + $0x4] sm:$0xf]
    %v85 = vld [vmem:[#allocation6 + $0x8] sm:$0xf]
    %v86 = vld [vmem:[#allocation6 + $0xc] sm:$0xf]
    %v87 = vld [vmem:[%s2] sm:$0x1]
    %v89 = vlaneseq
    %v90 = vshrl.u32 %v89, 7
    %v91 = vsub.s32 0, %v90
    %v92 = vrot.slane %v87, %v91
    %v98 = vunpack.c.l.b16 %v83
    %v99 = vunpack.c.l.b16 %v84
    %v100 = vunpack.c.l.b16 %v85
    %v101 = vunpack.c.l.b16 %v86
    %v102 = vpack.c.b16 %v99, %v98
    %v103 = vpack.c.b16 %v101, %v100
    %vm106 = vcmask 261120
    %v108 = vsel %vm106, %v82, 0
    %110 = vmatprep.subr.bf16.mxu0 0
    %111 = vmatpush1.bf16.msra.mxu0 0
    %112 = vmatprep.subr.bf16.mxu0 0
    %113 = vmatpush1.bf16.msra.mxu0 0
    %114 = vmatprep.subr.bf16.mxu0 0
    %115 = vmatpush1.bf16.msra.mxu0 0
    %116 = vmatprep.subr.bf16.mxu0 0
    %117 = vmatpush1.bf16.msra.mxu0 0
    %118 = vmatprep.subr.bf16.mxu0 0
    %119 = vmatpush1.bf16.msra.mxu0 0
    %120 = vmatprep.subr.bf16.mxu0 0
    %121 = vmatpush1.bf16.msra.mxu0 0
    %122 = vmatprep.subr.bf16.mxu0 0
    %123 = vmatpush1.bf16.msra.mxu0 %v103
    %124 = vmatprep.subr.bf16.mxu0 0
    %125 = vmatpush1.bf16.msra.mxu0 %v102
    %126 = vmatprep.subr.bf16.mxu0 0
    %127 = vmatpush2.bf16.msra.mxu0 0
    %128 = vmatprep.subr.bf16.mxu0 0
    %129 = vmatpush2.bf16.msra.mxu0 0
    %130 = vmatprep.subr.bf16.mxu0 0
    %131 = vmatpush2.bf16.msra.mxu0 0
    %132 = vmatprep.subr.bf16.mxu0 0
    %133 = vmatpush2.bf16.msra.mxu0 0
    %134 = vmatprep.subr.bf16.mxu0 0
    %135 = vmatpush2.bf16.msra.mxu0 0
    %136 = vmatprep.subr.bf16.mxu0 0
    %137 = vmatpush2.bf16.msra.mxu0 0
    %138 = vmatprep.subr.bf16.mxu0 0
    %139 = vmatpush2.bf16.msra.mxu0 0
    %140 = vmatprep.subr.bf16.mxu0 0
    %141 = vmatpush2.bf16.msra.mxu0 0
    %142 = vmatprep.mubr.bf16.mxu0 0
    %143 = vmatmul.mubr.bf16.gmra.mxu0 %v108
    %v144 = vpop.f32.mrf.mxu0
    %v145 = vadd.f32 %v92, %v144
    %v146 = vpop.f32.mrf.mxu0
    %v147 = vpop.f32.mrf.mxu0
    %v148 = vpop.f32.mrf.mxu0
    %149 = vdwg.mxu0
    %v150 = vpack.c.bf16 %v145, %v145
    %v155 = vunpack.c.l.b16 %v77
    %v156 = vunpack.c.l.b16 %v78
    %v157 = vunpack.c.l.b16 %v79
    %v158 = vunpack.c.l.b16 %v80
    %v159 = vpack.c.b16 %v156, %v155
    %v160 = vpack.c.b16 %v158, %v157
    %v164 = vsel %vm106, %v150, 0
    %166 = vmatprep.subr.bf16.mxu0 0
    %167 = vmatpush1.bf16.msra.mxu0 0
    %168 = vmatprep.subr.bf16.mxu0 0
    %169 = vmatpush1.bf16.msra.mxu0 0
    %170 = vmatprep.subr.bf16.mxu0 0
    %171 = vmatpush1.bf16.msra.mxu0 0
    %172 = vmatprep.subr.bf16.mxu0 0
    %173 = vmatpush1.bf16.msra.mxu0 0
    %174 = vmatprep.subr.bf16.mxu0 0
    %175 = vmatpush1.bf16.msra.mxu0 0
    %176 = vmatprep.subr.bf16.mxu0 0
    %177 = vmatpush1.bf16.msra.mxu0 0
    %178 = vmatprep.subr.bf16.mxu0 0
    %179 = vmatpush1.bf16.msra.mxu0 %v160
    %180 = vmatprep.subr.bf16.mxu0 0
    %181 = vmatpush1.bf16.msra.mxu0 %v159
    %182 = vmatprep.subr.bf16.mxu0 0
    %183 = vmatpush2.bf16.msra.mxu0 0
    %184 = vmatprep.subr.bf16.mxu0 0
    %185 = vmatpush2.bf16.msra.mxu0 0
    %186 = vmatprep.subr.bf16.mxu0 0
    %187 = vmatpush2.bf16.msra.mxu0 0
    %188 = vmatprep.subr.bf16.mxu0 0
    %189 = vmatpush2.bf16.msra.mxu0 0
    %190 = vmatprep.subr.bf16.mxu0 0
    %191 = vmatpush2.bf16.msra.mxu0 0
    %192 = vmatprep.subr.bf16.mxu0 0
    %193 = vmatpush2.bf16.msra.mxu0 0
    %194 = vmatprep.subr.bf16.mxu0 0
    %195 = vmatpush2.bf16.msra.mxu0 0
    %196 = vmatprep.subr.bf16.mxu0 0
    %197 = vmatpush2.bf16.msra.mxu0 0
    %198 = vmatprep.mubr.bf16.mxu0 0
    %199 = vmatmul.mubr.bf16.gmra.mxu0 %v164
    %v200 = vpop.f32.mrf.mxu0
    %v201 = vadd.f32 0.0, %v200
    %v202 = vpop.f32.mrf.mxu0
    %v203 = vpop.f32.mrf.mxu0
    %v204 = vpop.f32.mrf.mxu0
    %205 = vdwg.mxu0
    %v206 = vmax.f32 %v201, 0.0
    %v207 = vpack.c.bf16 %v206, %v206
    %v209 = vsel %vm106, %v207, 0
    %211 = vmatprep.subr.bf16.mxu0 0
    %212 = vmatpush1.bf16.msra.mxu0 0
    %213 = vmatprep.subr.bf16.mxu0 0
    %214 = vmatpush1.bf16.msra.mxu0 0
    %215 = vmatprep.subr.bf16.mxu0 0
    %216 = vmatpush1.bf16.msra.mxu0 0
    %217 = vmatprep.subr.bf16.mxu0 0
    %218 = vmatpush1.bf16.msra.mxu0 0
    %219 = vmatprep.subr.bf16.mxu0 0
    %220 = vmatpush1.bf16.msra.mxu0 0
    %221 = vmatprep.subr.bf16.mxu0 0
    %222 = vmatpush1.bf16.msra.mxu0 0
    %223 = vmatprep.subr.bf16.mxu0 0
    %224 = vmatpush1.bf16.msra.mxu0 %v160
    %225 = vmatprep.subr.bf16.mxu0 0
    %226 = vmatpush1.bf16.msra.mxu0 %v159
    %227 = vmatprep.subr.bf16.mxu0 0
    %228 = vmatpush2.bf16.msra.mxu0 0
    %229 = vmatprep.subr.bf16.mxu0 0
    %230 = vmatpush2.bf16.msra.mxu0 0
    %231 = vmatprep.subr.bf16.mxu0 0
    %232 = vmatpush2.bf16.msra.mxu0 0
    %233 = vmatprep.subr.bf16.mxu0 0
    %234 = vmatpush2.bf16.msra.mxu0 0
    %235 = vmatprep.subr.bf16.mxu0 0
    %236 = vmatpush2.bf16.msra.mxu0 0
    %237 = vmatprep.subr.bf16.mxu0 0
    %238 = vmatpush2.bf16.msra.mxu0 0
    %239 = vmatprep.subr.bf16.mxu0 0
    %240 = vmatpush2.bf16.msra.mxu0 0
    %241 = vmatprep.subr.bf16.mxu0 0
    %242 = vmatpush2.bf16.msra.mxu0 0
    %243 = vmatprep.mubr.bf16.mxu0 0
    %244 = vmatmul.mubr.bf16.gmra.mxu0 %v209
    %v245 = vpop.f32.mrf.mxu0
    %v246 = vadd.f32 0.0, %v245
    %v247 = vpop.f32.mrf.mxu0
    %v248 = vpop.f32.mrf.mxu0
    %v249 = vpop.f32.mrf.mxu0
    %250 = vdwg.mxu0
    %v251 = vmax.f32 %v246, 0.0
    %v252 = vpack.c.bf16 %v251, %v251
    %v254 = vsel %vm106, %v252, 0
    %256 = vmatprep.subr.bf16.mxu0 0
    %257 = vmatpush1.bf16.msra.mxu0 0
    %258 = vmatprep.subr.bf16.mxu0 0
    %259 = vmatpush1.bf16.msra.mxu0 0
    %260 = vmatprep.subr.bf16.mxu0 0
    %261 = vmatpush1.bf16.msra.mxu0 0
    %262 = vmatprep.subr.bf16.mxu0 0
    %263 = vmatpush1.bf16.msra.mxu0 0
    %264 = vmatprep.subr.bf16.mxu0 0
    %265 = vmatpush1.bf16.msra.mxu0 0
    %266 = vmatprep.subr.bf16.mxu0 0
    %267 = vmatpush1.bf16.msra.mxu0 0
    %268 = vmatprep.subr.bf16.mxu0 0
    %269 = vmatpush1.bf16.msra.mxu0 %v160
    %270 = vmatprep.subr.bf16.mxu0 0
    %271 = vmatpush1.bf16.msra.mxu0 %v159
    %272 = vmatprep.subr.bf16.mxu0 0
    %273 = vmatpush2.bf16.msra.mxu0 0
    %274 = vmatprep.subr.bf16.mxu0 0
    %275 = vmatpush2.bf16.msra.mxu0 0
    %276 = vmatprep.subr.bf16.mxu0 0
    %277 = vmatpush2.bf16.msra.mxu0 0
    %278 = vmatprep.subr.bf16.mxu0 0
    %279 = vmatpush2.bf16.msra.mxu0 0
    %280 = vmatprep.subr.bf16.mxu0 0
    %281 = vmatpush2.bf16.msra.mxu0 0
    %282 = vmatprep.subr.bf16.mxu0 0
    %283 = vmatpush2.bf16.msra.mxu0 0
    %284 = vmatprep.subr.bf16.mxu0 0
    %285 = vmatpush2.bf16.msra.mxu0 0
    %286 = vmatprep.subr.bf16.mxu0 0
    %287 = vmatpush2.bf16.msra.mxu0 0
    %288 = vmatprep.mubr.bf16.mxu0 0
    %289 = vmatmul.mubr.bf16.gmra.mxu0 %v254
    %v290 = vpop.f32.mrf.mxu0
    %v291 = vadd.f32 0.0, %v290
    %v292 = vpop.f32.mrf.mxu0
    %v293 = vpop.f32.mrf.mxu0
    %v294 = vpop.f32.mrf.mxu0
    %295 = vdwg.mxu0
    %v296 = vmax.f32 %v291, 0.0
    %v297 = vstv %s74
    %v298 = vmul.f32 %v297, %v145
    %v299 = vstv %s75
    %v300 = vmul.f32 %v299, %v296
    %v301 = vadd.f32 %v298, %v300
    %v302 = vstv %s76
    %v303 = vadd.f32 %v301, %v302
    %v304 = vpack.c.bf16 %v303, %v303
    %v306 = vsel %vm106, %v304, 0
    %308 = vmatprep.subr.bf16.mxu0 0
    %309 = vmatpush1.bf16.msra.mxu0 0
    %310 = vmatprep.subr.bf16.mxu0 0
    %311 = vmatpush1.bf16.msra.mxu0 0
    %312 = vmatprep.subr.bf16.mxu0 0
    %313 = vmatpush1.bf16.msra.mxu0 0
    %314 = vmatprep.subr.bf16.mxu0 0
    %315 = vmatpush1.bf16.msra.mxu0 0
    %316 = vmatprep.subr.bf16.mxu0 0
    %317 = vmatpush1.bf16.msra.mxu0 0
    %318 = vmatprep.subr.bf16.mxu0 0
    %319 = vmatpush1.bf16.msra.mxu0 0
    %320 = vmatprep.subr.bf16.mxu0 0
    %321 = vmatpush1.bf16.msra.mxu0 %v160
    %322 = vmatprep.subr.bf16.mxu0 0
    %323 = vmatpush1.bf16.msra.mxu0 %v159
    %324 = vmatprep.subr.bf16.mxu0 0
    %325 = vmatpush2.bf16.msra.mxu0 0
    %326 = vmatprep.subr.bf16.mxu0 0
    %327 = vmatpush2.bf16.msra.mxu0 0
    %328 = vmatprep.subr.bf16.mxu0 0
    %329 = vmatpush2.bf16.msra.mxu0 0
    %330 = vmatprep.subr.bf16.mxu0 0
    %331 = vmatpush2.bf16.msra.mxu0 0
    %332 = vmatprep.subr.bf16.mxu0 0
    %333 = vmatpush2.bf16.msra.mxu0 0
    %334 = vmatprep.subr.bf16.mxu0 0
    %335 = vmatpush2.bf16.msra.mxu0 0
    %336 = vmatprep.subr.bf16.mxu0 0
    %337 = vmatpush2.bf16.msra.mxu0 0
    %338 = vmatprep.subr.bf16.mxu0 0
    %339 = vmatpush2.bf16.msra.mxu0 0
    %340 = vmatprep.mubr.bf16.mxu0 0
    %341 = vmatmul.mubr.bf16.gmra.mxu0 %v306
    %v342 = vpop.f32.mrf.mxu0
    %v343 = vadd.f32 0.0, %v342
    %v344 = vpop.f32.mrf.mxu0
    %v345 = vpop.f32.mrf.mxu0
    %v346 = vpop.f32.mrf.mxu0
    %347 = vdwg.mxu0
    %v348 = vmax.f32 %v343, 0.0
    %v349 = vpack.c.bf16 %v348, %v348
    %v351 = vsel %vm106, %v349, 0
    %353 = vmatprep.subr.bf16.mxu0 0
    %354 = vmatpush1.bf16.msra.mxu0 0
    %355 = vmatprep.subr.bf16.mxu0 0
    %356 = vmatpush1.bf16.msra.mxu0 0
    %357 = vmatprep.subr.bf16.mxu0 0
    %358 = vmatpush1.bf16.msra.mxu0 0
    %359 = vmatprep.subr.bf16.mxu0 0
    %360 = vmatpush1.bf16.msra.mxu0 0
    %361 = vmatprep.subr.bf16.mxu0 0
    %362 = vmatpush1.bf16.msra.mxu0 0
    %363 = vmatprep.subr.bf16.mxu0 0
    %364 = vmatpush1.bf16.msra.mxu0 0
    %365 = vmatprep.subr.bf16.mxu0 0
    %366 = vmatpush1.bf16.msra.mxu0 %v160
    %367 = vmatprep.subr.bf16.mxu0 0
    %368 = vmatpush1.bf16.msra.mxu0 %v159
    %369 = vmatprep.subr.bf16.mxu0 0
    %370 = vmatpush2.bf16.msra.mxu0 0
    %371 = vmatprep.subr.bf16.mxu0 0
    %372 = vmatpush2.bf16.msra.mxu0 0
    %373 = vmatprep.subr.bf16.mxu0 0
    %374 = vmatpush2.bf16.msra.mxu0 0
    %375 = vmatprep.subr.bf16.mxu0 0
    %376 = vmatpush2.bf16.msra.mxu0 0
    %377 = vmatprep.subr.bf16.mxu0 0
    %378 = vmatpush2.bf16.msra.mxu0 0
    %379 = vmatprep.subr.bf16.mxu0 0
    %380 = vmatpush2.bf16.msra.mxu0 0
    %381 = vmatprep.subr.bf16.mxu0 0
    %382 = vmatpush2.bf16.msra.mxu0 0
    %383 = vmatprep.subr.bf16.mxu0 0
    %384 = vmatpush2.bf16.msra.mxu0 0
    %385 = vmatprep.mubr.bf16.mxu0 0
    %386 = vmatmul.mubr.bf16.gmra.mxu0 %v351
    %v387 = vpop.f32.mrf.mxu0
    %v388 = vadd.f32 0.0, %v387
    %v389 = vpop.f32.mrf.mxu0
    %v390 = vpop.f32.mrf.mxu0
    %v391 = vpop.f32.mrf.mxu0
    %392 = vdwg.mxu0
    %v393 = vmax.f32 %v388, 0.0
    %v394 = vpack.c.bf16 %v393, %v393
    %v396 = vsel %vm106, %v394, 0
    %398 = vmatprep.subr.bf16.mxu0 0
    %399 = vmatpush1.bf16.msra.mxu0 0
    %400 = vmatprep.subr.bf16.mxu0 0
    %401 = vmatpush1.bf16.msra.mxu0 0
    %402 = vmatprep.subr.bf16.mxu0 0
    %403 = vmatpush1.bf16.msra.mxu0 0
    %404 = vmatprep.subr.bf16.mxu0 0
    %405 = vmatpush1.bf16.msra.mxu0 0
    %406 = vmatprep.subr.bf16.mxu0 0
    %407 = vmatpush1.bf16.msra.mxu0 0
    %408 = vmatprep.subr.bf16.mxu0 0
    %409 = vmatpush1.bf16.msra.mxu0 0
    %410 = vmatprep.subr.bf16.mxu0 0
    %411 = vmatpush1.bf16.msra.mxu0 %v160
    %412 = vmatprep.subr.bf16.mxu0 0
    %413 = vmatpush1.bf16.msra.mxu0 %v159
    %414 = vmatprep.subr.bf16.mxu0 0
    %415 = vmatpush2.bf16.msra.mxu0 0
    %416 = vmatprep.subr.bf16.mxu0 0
    %417 = vmatpush2.bf16.msra.mxu0 0
    %418 = vmatprep.subr.bf16.mxu0 0
    %419 = vmatpush2.bf16.msra.mxu0 0
    %420 = vmatprep.subr.bf16.mxu0 0
    %421 = vmatpush2.bf16.msra.mxu0 0
    %422 = vmatprep.subr.bf16.mxu0 0
    %423 = vmatpush2.bf16.msra.mxu0 0
    %424 = vmatprep.subr.bf16.mxu0 0
    %425 = vmatpush2.bf16.msra.mxu0 0
    %426 = vmatprep.subr.bf16.mxu0 0
    %427 = vmatpush2.bf16.msra.mxu0 0
    %428 = vmatprep.subr.bf16.mxu0 0
    %429 = vmatpush2.bf16.msra.mxu0 0
    %430 = vmatprep.mubr.bf16.mxu0 0
    %431 = vmatmul.mubr.bf16.gmra.mxu0 %v396
    %v432 = vpop.f32.mrf.mxu0
    %v433 = vadd.f32 0.0, %v432
    %v434 = vpop.f32.mrf.mxu0
    %v435 = vpop.f32.mrf.mxu0
    %v436 = vpop.f32.mrf.mxu0
    %437 = vdwg.mxu0
    %v438 = vmax.f32 %v433, 0.0
    %v439 = vmul.f32 %v297, %v303
    %v440 = vmul.f32 %v299, %v438
    %v441 = vadd.f32 %v439, %v440
    %v442 = vadd.f32 %v441, %v302
    %v443 = vpack.c.bf16 %v442, %v442
    %v445 = vsel %vm106, %v443, 0
    %447 = vmatprep.subr.bf16.mxu0 0
    %448 = vmatpush1.bf16.msra.mxu0 0
    %449 = vmatprep.subr.bf16.mxu0 0
    %450 = vmatpush1.bf16.msra.mxu0 0
    %451 = vmatprep.subr.bf16.mxu0 0
    %452 = vmatpush1.bf16.msra.mxu0 0
    %453 = vmatprep.subr.bf16.mxu0 0
    %454 = vmatpush1.bf16.msra.mxu0 0
    %455 = vmatprep.subr.bf16.mxu0 0
    %456 = vmatpush1.bf16.msra.mxu0 0
    %457 = vmatprep.subr.bf16.mxu0 0
    %458 = vmatpush1.bf16.msra.mxu0 0
    %459 = vmatprep.subr.bf16.mxu0 0
    %460 = vmatpush1.bf16.msra.mxu0 %v160
    %461 = vmatprep.subr.bf16.mxu0 0
    %462 = vmatpush1.bf16.msra.mxu0 %v159
    %463 = vmatprep.subr.bf16.mxu0 0
    %464 = vmatpush2.bf16.msra.mxu0 0
    %465 = vmatprep.subr.bf16.mxu0 0
    %466 = vmatpush2.bf16.msra.mxu0 0
    %467 = vmatprep.subr.bf16.mxu0 0
    %468 = vmatpush2.bf16.msra.mxu0 0
    %469 = vmatprep.subr.bf16.mxu0 0
    %470 = vmatpush2.bf16.msra.mxu0 0
    %471 = vmatprep.subr.bf16.mxu0 0
    %472 = vmatpush2.bf16.msra.mxu0 0
    %473 = vmatprep.subr.bf16.mxu0 0
    %474 = vmatpush2.bf16.msra.mxu0 0
    %475 = vmatprep.subr.bf16.mxu0 0
    %476 = vmatpush2.bf16.msra.mxu0 0
    %477 = vmatprep.subr.bf16.mxu0 0
    %478 = vmatpush2.bf16.msra.mxu0 0
    %479 = vmatprep.mubr.bf16.mxu0 0
    %480 = vmatmul.mubr.bf16.gmra.mxu0 %v445
    %v481 = vpop.f32.mrf.mxu0
    %v482 = vadd.f32 0.0, %v481
    %v483 = vpop.f32.mrf.mxu0
    %v484 = vpop.f32.mrf.mxu0
    %v485 = vpop.f32.mrf.mxu0
    %486 = vdwg.mxu0
    %v487 = vmax.f32 %v482, 0.0
    %v488 = vpack.c.bf16 %v487, %v487
    %v490 = vsel %vm106, %v488, 0
    %492 = vmatprep.subr.bf16.mxu0 0
    %493 = vmatpush1.bf16.msra.mxu0 0
    %494 = vmatprep.subr.bf16.mxu0 0
    %495 = vmatpush1.bf16.msra.mxu0 0
    %496 = vmatprep.subr.bf16.mxu0 0
    %497 = vmatpush1.bf16.msra.mxu0 0
    %498 = vmatprep.subr.bf16.mxu0 0
    %499 = vmatpush1.bf16.msra.mxu0 0
    %500 = vmatprep.subr.bf16.mxu0 0
    %501 = vmatpush1.bf16.msra.mxu0 0
    %502 = vmatprep.subr.bf16.mxu0 0
    %503 = vmatpush1.bf16.msra.mxu0 0
    %504 = vmatprep.subr.bf16.mxu0 0
    %505 = vmatpush1.bf16.msra.mxu0 %v160
    %506 = vmatprep.subr.bf16.mxu0 0
    %507 = vmatpush1.bf16.msra.mxu0 %v159
    %508 = vmatprep.subr.bf16.mxu0 0
    %509 = vmatpush2.bf16.msra.mxu0 0
    %510 = vmatprep.subr.bf16.mxu0 0
    %511 = vmatpush2.bf16.msra.mxu0 0
    %512 = vmatprep.subr.bf16.mxu0 0
    %513 = vmatpush2.bf16.msra.mxu0 0
    %514 = vmatprep.subr.bf16.mxu0 0
    %515 = vmatpush2.bf16.msra.mxu0 0
    %516 = vmatprep.subr.bf16.mxu0 0
    %517 = vmatpush2.bf16.msra.mxu0 0
    %518 = vmatprep.subr.bf16.mxu0 0
    %519 = vmatpush2.bf16.msra.mxu0 0
    %520 = vmatprep.subr.bf16.mxu0 0
    %521 = vmatpush2.bf16.msra.mxu0 0
    %522 = vmatprep.subr.bf16.mxu0 0
    %523 = vmatpush2.bf16.msra.mxu0 0
    %524 = vmatprep.mubr.bf16.mxu0 0
    %525 = vmatmul.mubr.bf16.gmra.mxu0 %v490
    %v526 = vpop.f32.mrf.mxu0
    %v527 = vadd.f32 0.0, %v526
    %v528 = vpop.f32.mrf.mxu0
    %v529 = vpop.f32.mrf.mxu0
    %v530 = vpop.f32.mrf.mxu0
    %531 = vdwg.mxu0
    %v532 = vmax.f32 %v527, 0.0
    %v533 = vpack.c.bf16 %v532, %v532
    %v535 = vsel %vm106, %v533, 0
    %537 = vmatprep.subr.bf16.mxu0 0
    %538 = vmatpush1.bf16.msra.mxu0 0
    %539 = vmatprep.subr.bf16.mxu0 0
    %540 = vmatpush1.bf16.msra.mxu0 0
    %541 = vmatprep.subr.bf16.mxu0 0
    %542 = vmatpush1.bf16.msra.mxu0 0
    %543 = vmatprep.subr.bf16.mxu0 0
    %544 = vmatpush1.bf16.msra.mxu0 0
    %545 = vmatprep.subr.bf16.mxu0 0
    %546 = vmatpush1.bf16.msra.mxu0 0
    %547 = vmatprep.subr.bf16.mxu0 0
    %548 = vmatpush1.bf16.msra.mxu0 0
    %549 = vmatprep.subr.bf16.mxu0 0
    %550 = vmatpush1.bf16.msra.mxu0 %v160
    %551 = vmatprep.subr.bf16.mxu0 0
    %552 = vmatpush1.bf16.msra.mxu0 %v159
    %553 = vmatprep.subr.bf16.mxu0 0
    %554 = vmatpush2.bf16.msra.mxu0 0
    %555 = vmatprep.subr.bf16.mxu0 0
    %556 = vmatpush2.bf16.msra.mxu0 0
    %557 = vmatprep.subr.bf16.mxu0 0
    %558 = vmatpush2.bf16.msra.mxu0 0
    %559 = vmatprep.subr.bf16.mxu0 0
    %560 = vmatpush2.bf16.msra.mxu0 0
    %561 = vmatprep.subr.bf16.mxu0 0
    %562 = vmatpush2.bf16.msra.mxu0 0
    %563 = vmatprep.subr.bf16.mxu0 0
    %564 = vmatpush2.bf16.msra.mxu0 0
    %565 = vmatprep.subr.bf16.mxu0 0
    %566 = vmatpush2.bf16.msra.mxu0 0
    %567 = vmatprep.subr.bf16.mxu0 0
    %568 = vmatpush2.bf16.msra.mxu0 0
    %569 = vmatprep.mubr.bf16.mxu0 0
    %570 = vmatmul.mubr.bf16.gmra.mxu0 %v535
    %v571 = vpop.f32.mrf.mxu0
    %v572 = vadd.f32 0.0, %v571
    %v573 = vpop.f32.mrf.mxu0
    %v574 = vpop.f32.mrf.mxu0
    %v575 = vpop.f32.mrf.mxu0
    %576 = vdwg.mxu0
    %v577 = vmax.f32 %v572, 0.0
    %v578 = vmul.f32 %v297, %v442
    %v579 = vmul.f32 %v299, %v577
    %v580 = vadd.f32 %v578, %v579
    %v581 = vadd.f32 %v580, %v302
    %582 = vst.msk [vmem:[#allocation10] sm:$0xff] %vm106, %v581
    // Predicated region
    $region38: #{tpu_custom_call.1} parent=1 // pred_check
      _
    $region39: #{tpu_custom_call.1} parent=1 // pred_check_branch
      %584 = sbr.rel (0) target = $region41
    $region40: #{tpu_custom_call.1} parent=1 // pred_region
      %s586 = ssub.s32 128, 128
      %587 = vsyncadd [#allocation4], %s586
      %s589 = sshll.u32 [#allocation10], 4
      %s590 = int_to_ptr.vmem [resolvable:$true] %s589
      %592 = dma.vmem_to_hbm [thread:$0]  %s590, 128, %s5, [#allocation4]
    $region41: #{tpu_custom_call.1} parent=1 // pred_fallthru
      _
    // Predicated region
    $region42: #{tpu_custom_call.1} parent=1 // pred_check
      _
    $region43: #{tpu_custom_call.1} parent=1 // pred_check_branch
      %594 = sbr.rel (0) target = $region45
    $region44: #{tpu_custom_call.1} parent=1 // pred_region
      %595 = dma.done [#allocation4], 128
    $region45: #{tpu_custom_call.1} parent=1 // pred_fallthru
      _
    %596 = vsyncpa [#allocation3], 1
    %597 = vsyncpa [#allocation7], 1
    %598 = vsyncpa [#allocation4], 1
    %599 = vsyncpa [#allocation5], 1

</llo_original>
